<compile_context>
chip_gen: v7x
topology: tpu7x:2x2x1
jax: 0.10.0
libtpu: 0.0.40
codegen_flags: <defaults>
</compile_context>

<pallas_src>
import math
import functools

import jax
import jax.numpy as jnp
from jax.experimental import pallas as pl
from jax.experimental.pallas import tpu as pltpu


def make_pos_embedding(emb_size: int, maxlen: int = 5000) -> jnp.ndarray:
    """Deterministic sinusoidal table, identical to the PyTorch __init__."""
    den = jnp.exp(-jnp.arange(0, emb_size, 2, dtype=jnp.float32)
                  * (math.log(10000.0) / emb_size))
    pos = jnp.arange(0, maxlen, dtype=jnp.float32).reshape(maxlen, 1)
    angles = pos * den                                    # (maxlen, emb_size//2)
    pe = jnp.zeros((maxlen, emb_size), dtype=jnp.float32)
    pe = pe.at[:, 0::2].set(jnp.sin(angles))
    pe = pe.at[:, 1::2].set(jnp.cos(angles))
    return pe[:, None, :]                                 # (maxlen, 1, emb_size)


def _pe_add_kernel(x_ref, pe_ref, o_ref):
    # x_ref: (TS, B, E); pe_ref: (TS, E) -> broadcast over batch (sublane) axis.
    o_ref[...] = (x_ref[...] + pe_ref[...][:, None, :]).astype(o_ref.dtype)


def _pe_add_dropout_kernel(x_ref, pe_ref, u_ref, o_ref, *, p: float):
    # Inverted dropout: keep with prob (1 - p), scale kept values by 1/(1 - p).
    val = x_ref[...] + pe_ref[...][:, None, :]
    keep = u_ref[...] >= jnp.float32(p)
    scale = jnp.float32(1.0 / (1.0 - p))
    o_ref[...] = jnp.where(keep, val * scale,
                           jnp.zeros_like(val)).astype(o_ref.dtype)


def _choose_ts(S: int, B: int, E: int, itemsize: int,
               target_bytes: int = 2 << 20) -> int:
    """Sequence rows per block so each x/out block is ~2 MiB (mem-bound)."""
    ts = max(1, target_bytes // max(1, B * E * itemsize))
    if ts >= S:
        return S
    # Keep the pe (TS, E) block sublane-aligned (TS % 8 == 0).
    return min(S, max(8, (ts // 8) * 8))


def positional_encoding_forward(token_embedding: jnp.ndarray,
                                pos_embedding: jnp.ndarray,
                                dropout_p: float = 0.0,
                                rng=None,
                                training: bool = True) -> jnp.ndarray:
    """token_embedding: (S, B, E); pos_embedding: (maxlen, 1, E)."""
    S, B, E = token_embedding.shape
    dtype = token_embedding.dtype
    pe2d = pos_embedding[:S, 0, :].astype(dtype)          # (S, E) glue slice
    p = float(dropout_p) if training else 0.0

    ts = _choose_ts(S, B, E, jnp.dtype(dtype).itemsize)
    grid = (pl.cdiv(S, ts),)
    x_spec = pl.BlockSpec((ts, B, E), lambda i: (i, 0, 0))
    pe_spec = pl.BlockSpec((ts, E), lambda i: (i, 0))
    out_spec = pl.BlockSpec((ts, B, E), lambda i: (i, 0, 0))
    cparams = pltpu.CompilerParams(
        dimension_semantics=("parallel",),       # grid steps are independent
        vmem_limit_bytes=48 * 1024 * 1024)       # < v7x 64 MiB/TC, > v5e default

    if p > 0.0:
        if rng is None:
            rng = jax.random.PRNGKey(0)
        u = jax.random.uniform(rng, (S, B, E), dtype=jnp.float32)
        kernel = functools.partial(_pe_add_dropout_kernel, p=p)
        return pl.pallas_call(
            kernel,
            out_shape=jax.ShapeDtypeStruct((S, B, E), dtype),
            grid=grid,
            in_specs=[x_spec, pe_spec, x_spec],
            out_specs=out_spec,
            compiler_params=cparams,
        )(token_embedding, pe2d, u)

    return pl.pallas_call(
        _pe_add_kernel,
        out_shape=jax.ShapeDtypeStruct((S, B, E), dtype),
        grid=grid,
        in_specs=[x_spec, pe_spec],
        out_specs=out_spec,
        compiler_params=cparams,
    )(token_embedding, pe2d)


if __name__ == "__main__":
    S, B, E = 8, 2, 32
    key = jax.random.PRNGKey(0)
    kx, kd = jax.random.split(key)
    x = jax.random.normal(kx, (S, B, E), dtype=jnp.float32)

    pos_embedding = make_pos_embedding(E, maxlen=5000)

    # Eval / p=0 path: must exactly match x + pos_embedding[:S].
    out = positional_encoding_forward(x, pos_embedding, dropout_p=0.0,
                                      training=False)
    out = jax.block_until_ready(out)
    ref = x + pos_embedding[:S]
    assert out.shape == (S, B, E)
    assert jnp.allclose(out, ref, atol=1e-6), "mismatch vs reference add"

    # Training path with dropout: check against a same-mask reference.
    p = 0.1
    out_drop = positional_encoding_forward(x, pos_embedding, dropout_p=p,
                                           rng=kd, training=True)
    out_drop = jax.block_until_ready(out_drop)
    u_ref = jax.random.uniform(kd, (S, B, E), dtype=jnp.float32)
    keep_ref = u_ref >= jnp.float32(p)
    scale_ref = jnp.float32(1.0 / (1.0 - p))
    ref_drop = jnp.where(keep_ref, (x + pos_embedding[:S]) * scale_ref, 0.0)
    assert jnp.allclose(out_drop, ref_drop, atol=1e-6), "mismatch vs dropout ref"

    print("KERNEL_OK")
</pallas_src>

<mosaic_0001>
module attributes {stable_mosaic.version = 11 : i64} {
  func.func @_pe_add_kernel(%arg0: i32, %arg1: memref<8x2x32xf32, #tpu.memory_space<vmem>>, %arg2: memref<8x32xf32, #tpu.memory_space<vmem>>, %arg3: memref<8x2x32xf32, #tpu.memory_space<vmem>>) attributes {dimension_semantics = [#tpu.dimension_semantics<parallel>], iteration_bounds = array<i64: 1>, scalar_prefetch = 0 : i64, scratch_operands = 0 : i64, tpu.core_type = #tpu.core_type<tc>, window_params = [{transform_indices = @transform_0, window_bounds = array<i64: 8, 2, 32>}, {transform_indices = @transform_1, window_bounds = array<i64: 8, 32>}, {transform_indices = @transform_2, window_bounds = array<i64: 8, 2, 32>}]} {
    %c0 = arith.constant 0 : index
    %c0_0 = arith.constant 0 : index
    %c0_1 = arith.constant 0 : index
    %0 = vector.load %arg1[%c0, %c0_0, %c0_1] : memref<8x2x32xf32, #tpu.memory_space<vmem>>, vector<8x2x32xf32>
    %c0_2 = arith.constant 0 : index
    %c0_3 = arith.constant 0 : index
    %1 = vector.load %arg2[%c0_2, %c0_3] : memref<8x32xf32, #tpu.memory_space<vmem>>, vector<8x32xf32>
    %2 = vector.shape_cast %1 : vector<8x32xf32> to vector<8x1x32xf32>
    %3 = vector.broadcast %2 : vector<8x1x32xf32> to vector<8x2x32xf32>
    %4 = arith.addf %0, %3 : vector<8x2x32xf32>
    %c0_4 = arith.constant 0 : index
    %c0_5 = arith.constant 0 : index
    %c0_6 = arith.constant 0 : index
    %5 = vector.load %arg3[%c0_4, %c0_5, %c0_6] : memref<8x2x32xf32, #tpu.memory_space<vmem>>, vector<8x2x32xf32>
    tpu.vector_store %arg3[%c0_4, %c0_5, %c0_6], %4 {strides = array<i32>} : memref<8x2x32xf32, #tpu.memory_space<vmem>>, vector<8x2x32xf32>,
    return
  }
  func.func @transform_0(%arg0: i32) -> (i32, i32, i32) {
    %c0_i32 = arith.constant 0 : i32
    %c0_i32_0 = arith.constant 0 : i32
    %c0_i32_1 = arith.constant 0 : i32
    return %arg0, %c0_i32, %c0_i32_0 : i32, i32, i32
  }
  func.func @transform_1(%arg0: i32) -> (i32, i32) {
    %c0_i32 = arith.constant 0 : i32
    %c0_i32_0 = arith.constant 0 : i32
    return %arg0, %c0_i32 : i32, i32
  }
  func.func @transform_2(%arg0: i32) -> (i32, i32, i32) {
    %c0_i32 = arith.constant 0 : i32
    %c0_i32_0 = arith.constant 0 : i32
    %c0_i32_1 = arith.constant 0 : i32
    return %arg0, %c0_i32, %c0_i32_0 : i32, i32, i32
  }
}

</mosaic_0001>

<llo_original>
// kernel: tpu_custom_call.1
$region0: #{tpu_custom_call.1}
  #allocation0 [shape = 'u32[]', space=smem, size = 0x4, offset = 0x4, fixed_abs, tag = 'smem constant byte address 0x4 - core index']
  #allocation1 [shape = 'u32[144,128]{1,0:T(1,128)}', space=vmem, size = 0x12000, scoped, tag = 'internal scratch']
  %s0 = inlined_call_operand.hbm [shape: f32[8,2,32], index: 0, kind: input, shape index: {}]
  %s1 = inlined_call_operand.hbm [shape: f32[8,32], index: 1, kind: input, shape index: {}]
  %s2 = inlined_call_operand.hbm [shape: f32[8,2,32], index: 2, kind: output, shape index: {}]
  %s3 = sld [smem:[#allocation0]]
  $region26: #{tpu_custom_call.1} parent=0
    _
  %s5 = ssub.s32 1, %s3
  %s6 = scalar_select 0, %s5, %s3
  $region1: #{tpu_custom_call.1} parent=0
    #allocation2 [shape = 'u8[8192]{0}', space=vmem, size = 0x2000, scoped, tag = 'input window, operand 0, single buffered']
    #allocation3 [shape = 's32[1]{0}', space=sflag, size = 0x4, scoped, tag = 'scoped memory for tpu_custom_call.1']
    #allocation4 [shape = 's32[1]{0}', space=sflag, size = 0x4, scoped, tag = 'scoped memory for tpu_custom_call.1']
    #allocation5 [shape = 'u8[4096]{0}', space=vmem, size = 0x1000, scoped, tag = 'input window, operand 1, single buffered']
    #allocation6 [shape = 's32[1]{0}', space=sflag, size = 0x4, scoped, tag = 'scoped memory for tpu_custom_call.1']
    #allocation7 [shape = 'u8[8192]{0}', space=vmem, size = 0x2000, scoped, tag = 'output window, operand 0, single buffered']
    %7 = vsyncpa [#allocation3], 0
    %8 = vsyncpa [#allocation6], 0
    %9 = vsyncpa [#allocation4], 0
    // Predicated region
    $region2: #{tpu_custom_call.1} parent=1 // pred_check
      _
    $region3: #{tpu_custom_call.1} parent=1 // pred_check_branch
      %11 = sbr.rel (0) target = $region5
    $region4: #{tpu_custom_call.1} parent=1 // pred_region
      %s13 = ssub.s32 256, 256
      %14 = vsyncadd [#allocation3], %s13
      %s15 = sshll.u32 [#allocation2], 4
      %s16 = int_to_ptr.vmem [resolvable:$true] %s15
      %21 = dma.hbm_to_vmem [thread:$0]  %s0, 256, %s16, [#allocation3], 32, 32, 2
    $region5: #{tpu_custom_call.1} parent=1 // pred_fallthru
      _
    // Predicated region
    $region6: #{tpu_custom_call.1} parent=1 // pred_check
      _
    $region7: #{tpu_custom_call.1} parent=1 // pred_check_branch
      %23 = sbr.rel (0) target = $region9
    $region8: #{tpu_custom_call.1} parent=1 // pred_region
      %s25 = ssub.s32 128, 128
      %26 = vsyncadd [#allocation6], %s25
      %s28 = sshll.u32 [#allocation5], 4
      %s29 = int_to_ptr.vmem [resolvable:$true] %s28
      %31 = dma.hbm_to_vmem [thread:$0]  %s1, 128, %s29, [#allocation6]
    $region9: #{tpu_custom_call.1} parent=1 // pred_fallthru
      _
    // Predicated region
    $region10: #{tpu_custom_call.1} parent=1 // pred_check
      _
    $region11: #{tpu_custom_call.1} parent=1 // pred_check_branch
      %33 = sbr.rel (0) target = $region13
    $region12: #{tpu_custom_call.1} parent=1 // pred_region
      %34 = dma.done [#allocation3], 256
    $region13: #{tpu_custom_call.1} parent=1 // pred_fallthru
      _
    // Predicated region
    $region14: #{tpu_custom_call.1} parent=1 // pred_check
      _
    $region15: #{tpu_custom_call.1} parent=1 // pred_check_branch
      %36 = sbr.rel (0) target = $region17
    $region16: #{tpu_custom_call.1} parent=1 // pred_region
      %37 = dma.done [#allocation6], 128
    $region17: #{tpu_custom_call.1} parent=1 // pred_fallthru
      _
    %v38 = vld [vmem:[#allocation2] sm:$0x3]
    %v39 = vld [vmem:[#allocation2 + $0x2] sm:$0x3]
    %v40 = vld [vmem:[#allocation2 + $0x4] sm:$0x3]
    %v41 = vld [vmem:[#allocation2 + $0x6] sm:$0x3]
    %v42 = vld [vmem:[#allocation2 + $0x8] sm:$0x3]
    %v43 = vld [vmem:[#allocation2 + $0xa] sm:$0x3]
    %v44 = vld [vmem:[#allocation2 + $0xc] sm:$0x3]
    %v45 = vld [vmem:[#allocation2 + $0xe] sm:$0x3]
    %v46 = vld [vmem:[#allocation5] sm:$0xff]
    %v48 = vcombine.high %v46, %v46
    %v50 = vunpack.c.l.s4 1966171168
    %v51 = vunpack.c.0.s8 %v50
    %v52 = vlaneseq
    %v53 = vshrl.u32 %v52, 7
    %v54 = vsub.s32 %v51, %v53
    %v55 = vrot.slane %v46, %v54
    %v57 = vunpack.c.l.s4 1966171168
    %v58 = vunpack.c.0.s8 %v57
    %v59 = vlaneseq
    %v60 = vshrl.u32 %v59, 7
    %v61 = vsub.s32 %v58, %v60
    %v62 = vrot.slane %v48, %v61
    %v63 = vcombine.high %v55, %v55
    %v64 = vcombine.high %v62, %v62
    %v66 = vunpack.c.l.s4 1966171168
    %v67 = vunpack.c.0.s8 %v66
    %v68 = vlaneseq
    %v69 = vshrl.u32 %v68, 7
    %v70 = vsub.s32 %v67, %v69
    %v71 = vrot.slane %v55, %v70
    %v73 = vunpack.c.l.s4 1966171168
    %v74 = vunpack.c.0.s8 %v73
    %v75 = vlaneseq
    %v76 = vshrl.u32 %v75, 7
    %v77 = vsub.s32 %v74, %v76
    %v78 = vrot.slane %v62, %v77
    %v80 = vunpack.c.l.s4 1966171168
    %v81 = vunpack.c.0.s8 %v80
    %v82 = vlaneseq
    %v83 = vshrl.u32 %v82, 7
    %v84 = vsub.s32 %v81, %v83
    %v85 = vrot.slane %v63, %v84
    %v87 = vunpack.c.l.s4 1966171168
    %v88 = vunpack.c.0.s8 %v87
    %v89 = vlaneseq
    %v90 = vshrl.u32 %v89, 7
    %v91 = vsub.s32 %v88, %v90
    %v92 = vrot.slane %v64, %v91
    %v93 = vcombine.high %v71, %v71
    %v94 = vcombine.high %v78, %v78
    %v95 = vcombine.high %v85, %v85
    %v96 = vcombine.high %v92, %v92
    %v97 = vlaneseq
    %v98 = vshrl.u32 %v97, 7
    %v99 = vsub.s32 0, %v98
    %v100 = vrot.slane %v71, %v99
    %v101 = vlaneseq
    %v102 = vshrl.u32 %v101, 7
    %v103 = vsub.s32 0, %v102
    %v104 = vrot.slane %v85, %v103
    %v105 = vlaneseq
    %v106 = vshrl.u32 %v105, 7
    %v107 = vsub.s32 0, %v106
    %v108 = vrot.slane %v93, %v107
    %v109 = vlaneseq
    %v110 = vshrl.u32 %v109, 7
    %v111 = vsub.s32 0, %v110
    %v112 = vrot.slane %v95, %v111
    %v113 = vlaneseq
    %v114 = vshrl.u32 %v113, 7
    %v115 = vsub.s32 0, %v114
    %v116 = vrot.slane %v78, %v115
    %v117 = vlaneseq
    %v118 = vshrl.u32 %v117, 7
    %v119 = vsub.s32 0, %v118
    %v120 = vrot.slane %v92, %v119
    %v121 = vlaneseq
    %v122 = vshrl.u32 %v121, 7
    %v123 = vsub.s32 0, %v122
    %v124 = vrot.slane %v94, %v123
    %v125 = vlaneseq
    %v126 = vshrl.u32 %v125, 7
    %v127 = vsub.s32 0, %v126
    %v128 = vrot.slane %v96, %v127
    %v137 = vadd.f32 %v38, %v100
    %v138 = vadd.f32 %v39, %v104
    %v139 = vadd.f32 %v40, %v108
    %v140 = vadd.f32 %v41, %v112
    %v141 = vadd.f32 %v42, %v116
    %v142 = vadd.f32 %v43, %v120
    %v143 = vadd.f32 %v44, %v124
    %v144 = vadd.f32 %v45, %v128
    %vm145 = vcmask 254976
    %146 = vst.msk [vmem:[#allocation7] sm:$0x3] %vm145, %v137
    %147 = vst.msk [vmem:[#allocation7 + $0x2] sm:$0x3] %vm145, %v138
    %148 = vst.msk [vmem:[#allocation7 + $0x4] sm:$0x3] %vm145, %v139
    %149 = vst.msk [vmem:[#allocation7 + $0x6] sm:$0x3] %vm145, %v140
    %150 = vst.msk [vmem:[#allocation7 + $0x8] sm:$0x3] %vm145, %v141
    %151 = vst.msk [vmem:[#allocation7 + $0xa] sm:$0x3] %vm145, %v142
    %152 = vst.msk [vmem:[#allocation7 + $0xc] sm:$0x3] %vm145, %v143
    %153 = vst.msk [vmem:[#allocation7 + $0xe] sm:$0x3] %vm145, %v144
    // Predicated region
    $region18: #{tpu_custom_call.1} parent=1 // pred_check
      _
    $region19: #{tpu_custom_call.1} parent=1 // pred_check_branch
      %155 = sbr.rel (0) target = $region21
    $region20: #{tpu_custom_call.1} parent=1 // pred_region
      %s157 = ssub.s32 256, 256
      %158 = vsyncadd [#allocation4], %s157
      %s159 = sshll.u32 [#allocation7], 4
      %s160 = int_to_ptr.vmem [resolvable:$true] %s159
      %165 = dma.vmem_to_hbm [thread:$0]  %s160, 256, %s2, [#allocation4], 32, 32, 2
    $region21: #{tpu_custom_call.1} parent=1 // pred_fallthru
      _
    // Predicated region
    $region22: #{tpu_custom_call.1} parent=1 // pred_check
      _
    $region23: #{tpu_custom_call.1} parent=1 // pred_check_branch
      %167 = sbr.rel (0) target = $region25
    $region24: #{tpu_custom_call.1} parent=1 // pred_region
      %168 = dma.done [#allocation4], 256
    $region25: #{tpu_custom_call.1} parent=1 // pred_fallthru
      _
    %169 = vsyncpa [#allocation3], 1
    %170 = vsyncpa [#allocation6], 1
    %171 = vsyncpa [#allocation4], 1

</llo_original>
